<compile_context>
chip_gen: v6e
topology: v6e:2x2x1
jax: 0.10.0
libtpu: 0.0.40
codegen_flags: <defaults>
</compile_context>

<pallas_src>
import functools

import jax
import jax.numpy as jnp
from jax import lax
from jax.experimental import pallas as pl
from jax.experimental.pallas import tpu as pltpu


def _conv1x1_strided_add_kernel(x_ref, w_ref, b_ref, other_ref, out_ref, *,
                                flat_idx):
    """out[n,co,m] = b[co] + other[n,co,m] + sum_k w[co,k] * x[n,k,flat_idx[m]].

    x_ref:     (N, Cin, H*W)  full input, flattened spatial (free reshape of NCHW)
    w_ref:     (Cout, Cin)    conv weight in native PyTorch orientation
    b_ref:     (Cout, 1)      conv bias
    other_ref: (N, Cout, M)   residual, channels-first (free reshape of NCHW)
    out_ref:   (N, Cout, M)   channels-first output (free reshape back to NCHW)
    """
    N, Cin, _ = x_ref.shape
    _, Cout, M = out_ref.shape

    w = w_ref[...]                                      # (Cout, Cin)
    b = b_ref[...]                                      # (Cout, 1)
    # (1, M) one-hot lane rows used to place each strided pixel in its column.
    lane = lax.broadcasted_iota(jnp.int32, (1, M), 1)
    onehots = [(lane == m).astype(jnp.float32) for m in range(M)]

    for n in range(N):                                  # static unroll (N == 1)
        x = x_ref[n]                                    # (Cin, H*W)
        # In-kernel stride-8 spatial gather: xs[c, m] = x[c, flat_idx[m]].
        # Exact in f32 (multiplies by 1.0/0.0 one-hots, adds 0.0).
        xs = jnp.zeros((Cin, M), jnp.float32)
        for m, f in enumerate(flat_idx):                # M = 4 static pixels
            xs = xs + x[:, f:f + 1] * onehots[m]        # (Cin,1) * (1,M)
        # Channels-first accumulate: exact f32 VPU MACs, K = 9 static unroll.
        acc = b + other_ref[n]                          # (Cout,1) + (Cout,M)
        for k in range(Cin):
            acc = acc + w[:, k:k + 1] * xs[k:k + 1, :]  # (Cout,1) * (1,M)
        out_ref[n] = acc


@jax.jit
def model_forward(x1, weight, bias, other):
    """x1: (N, 9, H, W) NCHW; weight: (15, 9, 1, 1); bias: (15,);
    other: (N, 15, Ho, Wo) NCHW.  Returns (N, 15, Ho, Wo) NCHW."""
    N, Cin, H, W = x1.shape
    Cout = weight.shape[0]
    stride = 8
    Ho = (H - 1) // stride + 1
    Wo = (W - 1) // stride + 1
    M = Ho * Wo
    # Flattened-spatial indices of the stride-8 samples (static Python ints).
    flat_idx = tuple(ho * stride * W + wo * stride
                     for ho in range(Ho) for wo in range(Wo))

    # Channels-first all the way: every op below is a contiguous reshape
    # (free bitcast) — no transposes, no strided slices around the custom call.
    x_cf = x1.reshape(N, Cin, H * W).astype(jnp.float32)       # (N, Cin, H*W)
    other_cf = other.reshape(N, Cout, M).astype(jnp.float32)   # (N, Cout, M)
    w2d = weight.reshape(Cout, Cin).astype(jnp.float32)        # (Cout, Cin)
    b2d = bias.reshape(Cout, 1).astype(jnp.float32)            # (Cout, 1)

    vmem = pltpu.MemorySpace.VMEM
    out_cf = pl.pallas_call(
        functools.partial(_conv1x1_strided_add_kernel, flat_idx=flat_idx),
        out_shape=jax.ShapeDtypeStruct((N, Cout, M), jnp.float32),
        # Gridless, un-padded full-array blocks: the (8,128) rule is waived
        # when the block equals the full array; total operands < 16 KiB so no
        # tiling/pipelining is warranted at this size.
        in_specs=[
            pl.BlockSpec(memory_space=vmem),   # x_cf     (N, Cin, H*W)
            pl.BlockSpec(memory_space=vmem),   # w2d      (Cout, Cin)
            pl.BlockSpec(memory_space=vmem),   # b2d      (Cout, 1)
            pl.BlockSpec(memory_space=vmem),   # other_cf (N, Cout, M)
        ],
        out_specs=pl.BlockSpec(memory_space=vmem),
    )(x_cf, w2d, b2d, other_cf)

    # Channels-first output -> NCHW is a contiguous reshape (no transpose).
    return out_cf.reshape(N, Cout, Ho, Wo)


if __name__ == "__main__":
    key = jax.random.PRNGKey(0)
    k1, k2, k3, k4 = jax.random.split(key, 4)

    # Shapes implied by the module: Conv2d(9, 15, 1, stride=8), x1 (1,9,15,15).
    x1 = jax.random.normal(k1, (1, 9, 15, 15), dtype=jnp.float32)
    weight = jax.random.normal(k2, (15, 9, 1, 1), dtype=jnp.float32) * 0.1
    bias = jax.random.normal(k3, (15,), dtype=jnp.float32) * 0.1
    # Conv output spatial size with stride 8 on 15 is 2x2.
    # TODO(synk): spec's (1,4,15,15) `other` cannot broadcast with the conv
    # output in PyTorch either; using conv-output-shaped `other` instead.
    other = jax.random.normal(k4, (1, 15, 2, 2), dtype=jnp.float32)

    out = model_forward(x1, weight, bias, other)
    jax.block_until_ready(out)

    # Reference check in plain JAX (1x1 strided conv == channel matmul).
    x_s = x1[:, :, ::8, ::8]
    ref = (jnp.einsum("nchw,oc->nohw", x_s, weight.reshape(15, 9),
                      precision=jax.lax.Precision.HIGHEST)
           + bias.reshape(1, 15, 1, 1) + other)
    assert out.shape == (1, 15, 2, 2)
    assert jnp.allclose(out, ref, atol=1e-4, rtol=1e-4)

    print("KERNEL_OK")
</pallas_src>

<mosaic_0001>
module attributes {stable_mosaic.version = 11 : i64} {
  func.func @_conv1x1_strided_add_kernel(%arg0: memref<1x9x225xf32, #tpu.memory_space<vmem>>, %arg1: memref<15x9xf32, #tpu.memory_space<vmem>>, %arg2: memref<15x1xf32, #tpu.memory_space<vmem>>, %arg3: memref<1x15x4xf32, #tpu.memory_space<vmem>>, %arg4: memref<1x15x4xf32, #tpu.memory_space<vmem>>) attributes {dimension_semantics = [], scalar_prefetch = 0 : i64, scratch_operands = 0 : i64, tpu.core_type = #tpu.core_type<tc>} {
    %c0 = arith.constant 0 : index
    %c0_0 = arith.constant 0 : index
    %0 = vector.load %arg1[%c0, %c0_0] : memref<15x9xf32, #tpu.memory_space<vmem>>, vector<15x9xf32>
    %c0_1 = arith.constant 0 : index
    %c0_2 = arith.constant 0 : index
    %1 = vector.load %arg2[%c0_1, %c0_2] : memref<15x1xf32, #tpu.memory_space<vmem>>, vector<15x1xf32>
    %2 = tpu.iota {dimensions = array<i32: 1>} : vector<1x4xi32>
    %c0_i32 = arith.constant 0 : i32
    %3 = vector.broadcast %c0_i32 : i32 to vector<1x4xi32>
    %4 = arith.cmpi eq, %2, %3 : vector<1x4xi32>
    %5 = arith.extui %4 : vector<1x4xi1> to vector<1x4xi32>
    %6 = arith.sitofp %5 : vector<1x4xi32> to vector<1x4xf32>
    %c1_i32 = arith.constant 1 : i32
    %7 = vector.broadcast %c1_i32 : i32 to vector<1x4xi32>
    %8 = arith.cmpi eq, %2, %7 : vector<1x4xi32>
    %9 = arith.extui %8 : vector<1x4xi1> to vector<1x4xi32>
    %10 = arith.sitofp %9 : vector<1x4xi32> to vector<1x4xf32>
    %c2_i32 = arith.constant 2 : i32
    %11 = vector.broadcast %c2_i32 : i32 to vector<1x4xi32>
    %12 = arith.cmpi eq, %2, %11 : vector<1x4xi32>
    %13 = arith.extui %12 : vector<1x4xi1> to vector<1x4xi32>
    %14 = arith.sitofp %13 : vector<1x4xi32> to vector<1x4xf32>
    %c3_i32 = arith.constant 3 : i32
    %15 = vector.broadcast %c3_i32 : i32 to vector<1x4xi32>
    %16 = arith.cmpi eq, %2, %15 : vector<1x4xi32>
    %17 = arith.extui %16 : vector<1x4xi1> to vector<1x4xi32>
    %18 = arith.sitofp %17 : vector<1x4xi32> to vector<1x4xf32>
    %c0_3 = arith.constant 0 : index
    %c0_4 = arith.constant 0 : index
    %c0_5 = arith.constant 0 : index
    %19 = vector.load %arg0[%c0_3, %c0_4, %c0_5] : memref<1x9x225xf32, #tpu.memory_space<vmem>>, vector<1x9x225xf32>
    %20 = vector.shape_cast %19 : vector<1x9x225xf32> to vector<9x225xf32>
    %cst = arith.constant 0.000000e+00 : f32
    %21 = vector.broadcast %cst : f32 to vector<9x4xf32>
    %22 = vector.extract_strided_slice %20 {offsets = [0, 0], sizes = [9, 1], strides = [1, 1]} : vector<9x225xf32> to vector<9x1xf32>
    %23 = vector.broadcast %22 : vector<9x1xf32> to vector<9x4xf32>
    %24 = vector.broadcast %6 : vector<1x4xf32> to vector<9x4xf32>
    %25 = arith.mulf %23, %24 : vector<9x4xf32>
    %26 = arith.addf %21, %25 : vector<9x4xf32>
    %27 = vector.extract_strided_slice %20 {offsets = [0, 8], sizes = [9, 1], strides = [1, 1]} : vector<9x225xf32> to vector<9x1xf32>
    %28 = vector.broadcast %27 : vector<9x1xf32> to vector<9x4xf32>
    %29 = vector.broadcast %10 : vector<1x4xf32> to vector<9x4xf32>
    %30 = arith.mulf %28, %29 : vector<9x4xf32>
    %31 = arith.addf %26, %30 : vector<9x4xf32>
    %32 = vector.extract_strided_slice %20 {offsets = [0, 120], sizes = [9, 1], strides = [1, 1]} : vector<9x225xf32> to vector<9x1xf32>
    %33 = vector.broadcast %32 : vector<9x1xf32> to vector<9x4xf32>
    %34 = vector.broadcast %14 : vector<1x4xf32> to vector<9x4xf32>
    %35 = arith.mulf %33, %34 : vector<9x4xf32>
    %36 = arith.addf %31, %35 : vector<9x4xf32>
    %37 = vector.extract_strided_slice %20 {offsets = [0, 128], sizes = [9, 1], strides = [1, 1]} : vector<9x225xf32> to vector<9x1xf32>
    %38 = vector.broadcast %37 : vector<9x1xf32> to vector<9x4xf32>
    %39 = vector.broadcast %18 : vector<1x4xf32> to vector<9x4xf32>
    %40 = arith.mulf %38, %39 : vector<9x4xf32>
    %41 = arith.addf %36, %40 : vector<9x4xf32>
    %c0_6 = arith.constant 0 : index
    %c0_7 = arith.constant 0 : index
    %c0_8 = arith.constant 0 : index
    %42 = vector.load %arg3[%c0_6, %c0_7, %c0_8] : memref<1x15x4xf32, #tpu.memory_space<vmem>>, vector<1x15x4xf32>
    %43 = vector.shape_cast %42 : vector<1x15x4xf32> to vector<15x4xf32>
    %44 = vector.broadcast %1 : vector<15x1xf32> to vector<15x4xf32>
    %45 = arith.addf %44, %43 : vector<15x4xf32>
    %46 = vector.extract_strided_slice %0 {offsets = [0, 0], sizes = [15, 1], strides = [1, 1]} : vector<15x9xf32> to vector<15x1xf32>
    %47 = vector.extract_strided_slice %41 {offsets = [0, 0], sizes = [1, 4], strides = [1, 1]} : vector<9x4xf32> to vector<1x4xf32>
    %48 = vector.broadcast %46 : vector<15x1xf32> to vector<15x4xf32>
    %49 = vector.broadcast %47 : vector<1x4xf32> to vector<15x4xf32>
    %50 = arith.mulf %48, %49 : vector<15x4xf32>
    %51 = arith.addf %45, %50 : vector<15x4xf32>
    %52 = vector.extract_strided_slice %0 {offsets = [0, 1], sizes = [15, 1], strides = [1, 1]} : vector<15x9xf32> to vector<15x1xf32>
    %53 = vector.extract_strided_slice %41 {offsets = [1, 0], sizes = [1, 4], strides = [1, 1]} : vector<9x4xf32> to vector<1x4xf32>
    %54 = vector.broadcast %52 : vector<15x1xf32> to vector<15x4xf32>
    %55 = vector.broadcast %53 : vector<1x4xf32> to vector<15x4xf32>
    %56 = arith.mulf %54, %55 : vector<15x4xf32>
    %57 = arith.addf %51, %56 : vector<15x4xf32>
    %58 = vector.extract_strided_slice %0 {offsets = [0, 2], sizes = [15, 1], strides = [1, 1]} : vector<15x9xf32> to vector<15x1xf32>
    %59 = vector.extract_strided_slice %41 {offsets = [2, 0], sizes = [1, 4], strides = [1, 1]} : vector<9x4xf32> to vector<1x4xf32>
    %60 = vector.broadcast %58 : vector<15x1xf32> to vector<15x4xf32>
    %61 = vector.broadcast %59 : vector<1x4xf32> to vector<15x4xf32>
    %62 = arith.mulf %60, %61 : vector<15x4xf32>
    %63 = arith.addf %57, %62 : vector<15x4xf32>
    %64 = vector.extract_strided_slice %0 {offsets = [0, 3], sizes = [15, 1], strides = [1, 1]} : vector<15x9xf32> to vector<15x1xf32>
    %65 = vector.extract_strided_slice %41 {offsets = [3, 0], sizes = [1, 4], strides = [1, 1]} : vector<9x4xf32> to vector<1x4xf32>
    %66 = vector.broadcast %64 : vector<15x1xf32> to vector<15x4xf32>
    %67 = vector.broadcast %65 : vector<1x4xf32> to vector<15x4xf32>
    %68 = arith.mulf %66, %67 : vector<15x4xf32>
    %69 = arith.addf %63, %68 : vector<15x4xf32>
    %70 = vector.extract_strided_slice %0 {offsets = [0, 4], sizes = [15, 1], strides = [1, 1]} : vector<15x9xf32> to vector<15x1xf32>
    %71 = vector.extract_strided_slice %41 {offsets = [4, 0], sizes = [1, 4], strides = [1, 1]} : vector<9x4xf32> to vector<1x4xf32>
    %72 = vector.broadcast %70 : vector<15x1xf32> to vector<15x4xf32>
    %73 = vector.broadcast %71 : vector<1x4xf32> to vector<15x4xf32>
    %74 = arith.mulf %72, %73 : vector<15x4xf32>
    %75 = arith.addf %69, %74 : vector<15x4xf32>
    %76 = vector.extract_strided_slice %0 {offsets = [0, 5], sizes = [15, 1], strides = [1, 1]} : vector<15x9xf32> to vector<15x1xf32>
    %77 = vector.extract_strided_slice %41 {offsets = [5, 0], sizes = [1, 4], strides = [1, 1]} : vector<9x4xf32> to vector<1x4xf32>
    %78 = vector.broadcast %76 : vector<15x1xf32> to vector<15x4xf32>
    %79 = vector.broadcast %77 : vector<1x4xf32> to vector<15x4xf32>
    %80 = arith.mulf %78, %79 : vector<15x4xf32>
    %81 = arith.addf %75, %80 : vector<15x4xf32>
    %82 = vector.extract_strided_slice %0 {offsets = [0, 6], sizes = [15, 1], strides = [1, 1]} : vector<15x9xf32> to vector<15x1xf32>
    %83 = vector.extract_strided_slice %41 {offsets = [6, 0], sizes = [1, 4], strides = [1, 1]} : vector<9x4xf32> to vector<1x4xf32>
    %84 = vector.broadcast %82 : vector<15x1xf32> to vector<15x4xf32>
    %85 = vector.broadcast %83 : vector<1x4xf32> to vector<15x4xf32>
    %86 = arith.mulf %84, %85 : vector<15x4xf32>
    %87 = arith.addf %81, %86 : vector<15x4xf32>
    %88 = vector.extract_strided_slice %0 {offsets = [0, 7], sizes = [15, 1], strides = [1, 1]} : vector<15x9xf32> to vector<15x1xf32>
    %89 = vector.extract_strided_slice %41 {offsets = [7, 0], sizes = [1, 4], strides = [1, 1]} : vector<9x4xf32> to vector<1x4xf32>
    %90 = vector.broadcast %88 : vector<15x1xf32> to vector<15x4xf32>
    %91 = vector.broadcast %89 : vector<1x4xf32> to vector<15x4xf32>
    %92 = arith.mulf %90, %91 : vector<15x4xf32>
    %93 = arith.addf %87, %92 : vector<15x4xf32>
    %94 = vector.extract_strided_slice %0 {offsets = [0, 8], sizes = [15, 1], strides = [1, 1]} : vector<15x9xf32> to vector<15x1xf32>
    %95 = vector.extract_strided_slice %41 {offsets = [8, 0], sizes = [1, 4], strides = [1, 1]} : vector<9x4xf32> to vector<1x4xf32>
    %96 = vector.broadcast %94 : vector<15x1xf32> to vector<15x4xf32>
    %97 = vector.broadcast %95 : vector<1x4xf32> to vector<15x4xf32>
    %98 = arith.mulf %96, %97 : vector<15x4xf32>
    %99 = arith.addf %93, %98 : vector<15x4xf32>
    %c0_9 = arith.constant 0 : index
    %c0_10 = arith.constant 0 : index
    %c0_11 = arith.constant 0 : index
    %100 = vector.load %arg4[%c0_9, %c0_10, %c0_11] : memref<1x15x4xf32, #tpu.memory_space<vmem>>, vector<1x15x4xf32>
    %101 = vector.shape_cast %100 : vector<1x15x4xf32> to vector<15x4xf32>
    %102 = vector.shape_cast %99 : vector<15x4xf32> to vector<1x15x4xf32>
    tpu.vector_store %arg4[%c0_9, %c0_10, %c0_11], %102 {strides = array<i32>} : memref<1x15x4xf32, #tpu.memory_space<vmem>>, vector<1x15x4xf32>,
    return
  }
}

</mosaic_0001>

<llo_original>
// kernel: model_forward.1
$region0: #{model_forward.1}
  #allocation0 [shape = 'u32[]', space=smem, size = 0x4, offset = 0x4, fixed_abs, tag = 'smem constant byte address 0x4 - core index']
  #allocation1 [shape = 'u32[144,128]{1,0:T(1,128)}', space=vmem, size = 0x12000, scoped, tag = 'internal scratch']
  %s0 = inlined_call_operand.vmem [shape: f32[1,9,225], index: 0, kind: input, shape index: {}]
  %s1 = inlined_call_operand.vmem [shape: f32[15,9], index: 1, kind: input, shape index: {}]
  %s2 = inlined_call_operand.vmem [shape: f32[15,1], index: 2, kind: input, shape index: {}]
  %s3 = inlined_call_operand.vmem [shape: f32[1,15,4], index: 3, kind: input, shape index: {}]
  %s4 = inlined_call_operand.vmem [shape: f32[1,15,4], index: 4, kind: output, shape index: {}]
  %s5 = sld [smem:[#allocation0]]
  $region26: #{model_forward.1} parent=0
    _
  %s7 = ssub.s32 1, %s5
  %s8 = scalar_select 0, %s7, %s5
  // Predicated region
  $region2: #{model_forward.1} parent=0 // pred_check
    _
  $region3: #{model_forward.1} parent=0 // pred_check_branch
    %10 = sbr.rel (0) target = $region5
  $region4: #{model_forward.1} parent=0 // pred_region
    _
  $region5: #{model_forward.1} parent=0 // pred_fallthru
    _
  // Predicated region
  $region6: #{model_forward.1} parent=0 // pred_check
    _
  $region7: #{model_forward.1} parent=0 // pred_check_branch
    %12 = sbr.rel (0) target = $region9
  $region8: #{model_forward.1} parent=0 // pred_region
    _
  $region9: #{model_forward.1} parent=0 // pred_fallthru
    _
  // Predicated region
  $region10: #{model_forward.1} parent=0 // pred_check
    _
  $region11: #{model_forward.1} parent=0 // pred_check_branch
    %14 = sbr.rel (0) target = $region13
  $region12: #{model_forward.1} parent=0 // pred_region
    _
  $region13: #{model_forward.1} parent=0 // pred_fallthru
    _
  // Predicated region
  $region14: #{model_forward.1} parent=0 // pred_check
    _
  $region15: #{model_forward.1} parent=0 // pred_check_branch
    %16 = sbr.rel (0) target = $region17
  $region16: #{model_forward.1} parent=0 // pred_region
    _
  $region17: #{model_forward.1} parent=0 // pred_fallthru
    _
  %v17 = vld [vmem:[%s1] sm:$0xff]
  %v18 = vld [vmem:[%s1 + $0x8] sm:$0x7f]
  %v19 = vld [vmem:[%s2] sm:$0xff]
  %v20 = vld [vmem:[%s2 + $0x8] sm:$0x7f]
  %v21 = vlaneseq
  %v22 = vand.u32 %v21, 127
  %vm23 = vcmp.eq.s32.totalorder %v22, 0
  %v24 = vsel %vm23, 1, 0
  %v25 = vcvt.s32.f32 %v24
  %vm26 = vcmp.eq.s32.totalorder %v22, 1
  %v27 = vsel %vm26, 1, 0
  %v28 = vcvt.s32.f32 %v27
  %vm29 = vcmp.eq.s32.totalorder %v22, 2
  %v30 = vsel %vm29, 1, 0
  %v31 = vcvt.s32.f32 %v30
  %vm32 = vcmp.eq.s32.totalorder %v22, 3
  %v33 = vsel %vm32, 1, 0
  %v34 = vcvt.s32.f32 %v33
  %v35 = vld [vmem:[%s0] sm:$0xff]
  %v36 = vld [vmem:[%s0 + $0x8] sm:$0xff]
  %v37 = vld [vmem:[%s0 + $0x10] sm:$0x1]
  %v38 = vld [vmem:[%s0 + $0x18] sm:$0x1]
  %40 = vset.pattern.permute.xlu0 0
  %41 = vperm.xlu0 %40, %v35
  %v42 = vpop.permute.xlu0 %41
  %45 = vset.pattern.permute.xlu0 0
  %46 = vperm.xlu0 %45, %v37
  %v47 = vpop.permute.xlu0 %46
  %v49 = vmul.f32 %v42, %v25
  %v50 = vmul.f32 %v47, %v25
  %v51 = vadd.f32 %v49, 0.0
  %v52 = vadd.f32 %v50, 0.0
  %53 = vset.pattern.permute.xlu0 8
  %54 = vperm.xlu0 %53, %v35
  %v55 = vpop.permute.xlu0 %54
  %57 = vset.pattern.permute.xlu0 8
  %58 = vperm.xlu0 %57, %v37
  %v59 = vpop.permute.xlu0 %58
  %v61 = vmul.f32 %v55, %v28
  %v62 = vmul.f32 %v59, %v28
  %v63 = vadd.f32 %v51, %v61
  %v64 = vadd.f32 %v52, %v62
  %65 = vset.pattern.permute.xlu0 120
  %66 = vperm.xlu0 %65, %v35
  %v67 = vpop.permute.xlu0 %66
  %69 = vset.pattern.permute.xlu0 120
  %70 = vperm.xlu0 %69, %v37
  %v71 = vpop.permute.xlu0 %70
  %v73 = vmul.f32 %v67, %v31
  %v74 = vmul.f32 %v71, %v31
  %v75 = vadd.f32 %v63, %v73
  %v76 = vadd.f32 %v64, %v74
  %78 = vset.pattern.permute.xlu0 0
  %79 = vperm.xlu0 %78, %v36
  %v80 = vpop.permute.xlu0 %79
  %83 = vset.pattern.permute.xlu0 0
  %84 = vperm.xlu0 %83, %v38
  %v85 = vpop.permute.xlu0 %84
  %v87 = vmul.f32 %v80, %v34
  %v88 = vmul.f32 %v85, %v34
  %v89 = vadd.f32 %v75, %v87
  %v90 = vadd.f32 %v76, %v88
  %v91 = vld [vmem:[%s3] sm:$0xff]
  %v92 = vld [vmem:[%s3 + $0x8] sm:$0x7f]
  %94 = vset.pattern.permute.xlu0 0
  %95 = vperm.xlu0 %94, %v19
  %v96 = vpop.permute.xlu0 %95
  %99 = vset.pattern.permute.xlu0 0
  %100 = vperm.xlu0 %99, %v20
  %v101 = vpop.permute.xlu0 %100
  %v103 = vadd.f32 %v96, %v91
  %v104 = vadd.f32 %v101, %v92
  %106 = vset.pattern.permute.xlu0 0
  %107 = vperm.xlu0 %106, %v17
  %v108 = vpop.permute.xlu0 %107
  %111 = vset.pattern.permute.xlu0 0
  %112 = vperm.xlu0 %111, %v18
  %v113 = vpop.permute.xlu0 %112
  %v115 = vlaneseq
  %v116 = vshrl.u32 %v115, 7
  %v117 = vsub.s32 0, %v116
  %v118 = vrot.slane %v89, %v117
  %v119 = vmul.f32 %v108, %v118
  %v120 = vmul.f32 %v113, %v118
  %v121 = vadd.f32 %v103, %v119
  %v122 = vadd.f32 %v104, %v120
  %123 = vset.pattern.permute.xlu0 1
  %124 = vperm.xlu0 %123, %v17
  %v125 = vpop.permute.xlu0 %124
  %127 = vset.pattern.permute.xlu0 1
  %128 = vperm.xlu0 %127, %v18
  %v129 = vpop.permute.xlu0 %128
  %v131 = vlaneseq
  %v132 = vshrl.u32 %v131, 7
  %v133 = vsub.s32 1, %v132
  %v134 = vrot.slane %v89, %v133
  %v135 = vmul.f32 %v125, %v134
  %v136 = vmul.f32 %v129, %v134
  %v137 = vadd.f32 %v121, %v135
  %v138 = vadd.f32 %v122, %v136
  %139 = vset.pattern.permute.xlu0 2
  %140 = vperm.xlu0 %139, %v17
  %v141 = vpop.permute.xlu0 %140
  %143 = vset.pattern.permute.xlu0 2
  %144 = vperm.xlu0 %143, %v18
  %v145 = vpop.permute.xlu0 %144
  %v147 = vlaneseq
  %v148 = vshrl.u32 %v147, 7
  %v149 = vsub.s32 2, %v148
  %v150 = vrot.slane %v89, %v149
  %v151 = vmul.f32 %v141, %v150
  %v152 = vmul.f32 %v145, %v150
  %v153 = vadd.f32 %v137, %v151
  %v154 = vadd.f32 %v138, %v152
  %155 = vset.pattern.permute.xlu0 3
  %156 = vperm.xlu0 %155, %v17
  %v157 = vpop.permute.xlu0 %156
  %159 = vset.pattern.permute.xlu0 3
  %160 = vperm.xlu0 %159, %v18
  %v161 = vpop.permute.xlu0 %160
  %v163 = vlaneseq
  %v164 = vshrl.u32 %v163, 7
  %v165 = vsub.s32 3, %v164
  %v166 = vrot.slane %v89, %v165
  %v167 = vmul.f32 %v157, %v166
  %v168 = vmul.f32 %v161, %v166
  %v169 = vadd.f32 %v153, %v167
  %v170 = vadd.f32 %v154, %v168
  %171 = vset.pattern.permute.xlu0 4
  %172 = vperm.xlu0 %171, %v17
  %v173 = vpop.permute.xlu0 %172
  %175 = vset.pattern.permute.xlu0 4
  %176 = vperm.xlu0 %175, %v18
  %v177 = vpop.permute.xlu0 %176
  %v179 = vlaneseq
  %v180 = vshrl.u32 %v179, 7
  %v181 = vsub.s32 4, %v180
  %v182 = vrot.slane %v89, %v181
  %v183 = vmul.f32 %v173, %v182
  %v184 = vmul.f32 %v177, %v182
  %v185 = vadd.f32 %v169, %v183
  %v186 = vadd.f32 %v170, %v184
  %187 = vset.pattern.permute.xlu0 5
  %188 = vperm.xlu0 %187, %v17
  %v189 = vpop.permute.xlu0 %188
  %191 = vset.pattern.permute.xlu0 5
  %192 = vperm.xlu0 %191, %v18
  %v193 = vpop.permute.xlu0 %192
  %v195 = vlaneseq
  %v196 = vshrl.u32 %v195, 7
  %v197 = vsub.s32 5, %v196
  %v198 = vrot.slane %v89, %v197
  %v199 = vmul.f32 %v189, %v198
  %v200 = vmul.f32 %v193, %v198
  %v201 = vadd.f32 %v185, %v199
  %v202 = vadd.f32 %v186, %v200
  %203 = vset.pattern.permute.xlu0 6
  %204 = vperm.xlu0 %203, %v17
  %v205 = vpop.permute.xlu0 %204
  %207 = vset.pattern.permute.xlu0 6
  %208 = vperm.xlu0 %207, %v18
  %v209 = vpop.permute.xlu0 %208
  %v211 = vlaneseq
  %v212 = vshrl.u32 %v211, 7
  %v213 = vsub.s32 6, %v212
  %v214 = vrot.slane %v89, %v213
  %v215 = vmul.f32 %v205, %v214
  %v216 = vmul.f32 %v209, %v214
  %v217 = vadd.f32 %v201, %v215
  %v218 = vadd.f32 %v202, %v216
  %219 = vset.pattern.permute.xlu0 7
  %220 = vperm.xlu0 %219, %v17
  %v221 = vpop.permute.xlu0 %220
  %223 = vset.pattern.permute.xlu0 7
  %224 = vperm.xlu0 %223, %v18
  %v225 = vpop.permute.xlu0 %224
  %v227 = vlaneseq
  %v228 = vshrl.u32 %v227, 7
  %v229 = vsub.s32 7, %v228
  %v230 = vrot.slane %v89, %v229
  %v231 = vmul.f32 %v221, %v230
  %v232 = vmul.f32 %v225, %v230
  %v233 = vadd.f32 %v217, %v231
  %v234 = vadd.f32 %v218, %v232
  %235 = vset.pattern.permute.xlu0 8
  %236 = vperm.xlu0 %235, %v17
  %v237 = vpop.permute.xlu0 %236
  %239 = vset.pattern.permute.xlu0 8
  %240 = vperm.xlu0 %239, %v18
  %v241 = vpop.permute.xlu0 %240
  %v243 = vlaneseq
  %v244 = vshrl.u32 %v243, 7
  %v245 = vsub.s32 0, %v244
  %v246 = vrot.slane %v90, %v245
  %v247 = vmul.f32 %v237, %v246
  %v248 = vmul.f32 %v241, %v246
  %v249 = vadd.f32 %v233, %v247
  %v250 = vadd.f32 %v234, %v248
  %vm251 = vcmask 31744
  %252 = vst.msk [vmem:[%s4] sm:$0xff] %vm251, %v249
  %vm253 = vcmask 30720
  %254 = vst.msk [vmem:[%s4 + $0x8] sm:$0x7f] %vm253, %v250
  // Predicated region
  $region18: #{model_forward.1} parent=0 // pred_check
    _
  $region19: #{model_forward.1} parent=0 // pred_check_branch
    %256 = sbr.rel (0) target = $region21
  $region20: #{model_forward.1} parent=0 // pred_region
    _
  $region21: #{model_forward.1} parent=0 // pred_fallthru
    _
  // Predicated region
  $region22: #{model_forward.1} parent=0 // pred_check
    _
  $region23: #{model_forward.1} parent=0 // pred_check_branch
    %258 = sbr.rel (0) target = $region25
  $region24: #{model_forward.1} parent=0 // pred_region
    _
  $region25: #{model_forward.1} parent=0 // pred_fallthru
    _

</llo_original>
